<compile_context>
chip_gen: v7x
topology: tpu7x:2x2x1
jax: 0.10.0
libtpu: 0.0.40
codegen_flags: <defaults>
</compile_context>

<pallas_src>
import jax
import jax.numpy as jnp
from jax.experimental import pallas as pl
from jax.experimental.pallas import tpu as pltpu

_HW = 4          # H*W = 2*2 spatial positions (fixed by fc1's 4*2*2 input)
_OUT_PAD = 128   # lane-dense padded output width


# --------------------------- fused Pallas kernel -----------------------------

def fused_forward_kernel(x_ref, w1_ref, b1_ref, w2_ref, b2_ref,
                         w3_ref, b3_ref, w4_ref, b4_ref, o_ref):
    """conv1+relu -> conv2+relu -> fc1+relu -> fc2, all in one body.

    x : (B, 8)        pixel-major (NHWC) flatten of the (B,2,2,2) input
    w1: (8, 32)       block-diag(conv1_w x 4)       b1: (1, 32)
    w2: (32, 16)      block-diag(conv2_w x 4)       b2: (1, 16)
    w3: (16, 16)      fc1 weight, rows permuted to pixel-major order
    b3: (1, 16)
    w4: (16, 128)     fc2 weight, lane-padded to 128 (cols 4.. are zero)
    b4: (1, 128)
    o : (B, 128)      only the first 4 lanes are meaningful
    """
    x = x_ref[...]
    h = jnp.maximum(
        jnp.dot(x, w1_ref[...], preferred_element_type=jnp.float32) + b1_ref[...], 0.0)
    y = jnp.maximum(
        jnp.dot(h, w2_ref[...], preferred_element_type=jnp.float32) + b2_ref[...], 0.0)
    z = jnp.maximum(
        jnp.dot(y, w3_ref[...], preferred_element_type=jnp.float32) + b3_ref[...], 0.0)
    o_ref[...] = (
        jnp.dot(z, w4_ref[...], preferred_element_type=jnp.float32) + b4_ref[...])


# --------------------------- params & packing --------------------------------

def init_params(key):
    ks = jax.random.split(key, 8)
    s = 0.1
    return {
        # conv1: torch weight (8, 2, 1, 1) -> matmul weight (Cin=2, Cout=8)
        "conv1_w": jax.random.normal(ks[0], (2, 8), jnp.float32) * s,
        "conv1_b": jax.random.normal(ks[1], (1, 8), jnp.float32) * s,
        # conv2: torch weight (4, 8, 1, 1) -> (8, 4)
        "conv2_w": jax.random.normal(ks[2], (8, 4), jnp.float32) * s,
        "conv2_b": jax.random.normal(ks[3], (1, 4), jnp.float32) * s,
        # fc1: torch weight (16, 16) -> (16_in, 16_out) for x @ W
        "fc1_w": jax.random.normal(ks[4], (16, 16), jnp.float32) * s,
        "fc1_b": jax.random.normal(ks[5], (1, 16), jnp.float32) * s,
        # fc2: torch weight (4, 16) -> (16, 4)
        "fc2_w": jax.random.normal(ks[6], (16, 4), jnp.float32) * s,
        "fc2_b": jax.random.normal(ks[7], (1, 4), jnp.float32) * s,
    }


def pack_params(params):
    """One-time repack of torch-layout params into the fused-kernel layout."""
    eye = jnp.eye(_HW, dtype=jnp.float32)
    # 1x1 convs as block-diagonal matmuls on the pixel-major flatten.
    w1 = jnp.kron(eye, params["conv1_w"])               # (8, 32)
    b1 = jnp.tile(params["conv1_b"], (1, _HW))          # (1, 32)
    w2 = jnp.kron(eye, params["conv2_w"])               # (32, 16)
    b2 = jnp.tile(params["conv2_b"], (1, _HW))          # (1, 16)
    # Fold pixel-major -> channel-major (torch .view on NCHW) permutation
    # into fc1's rows: row k=p*C+c of the packed weight is row c*HW+p of fc1.
    c_out2 = params["conv2_w"].shape[1]                 # 4
    perm = jnp.array([(k % c_out2) * _HW + (k // c_out2)
                      for k in range(c_out2 * _HW)], dtype=jnp.int32)
    w3 = params["fc1_w"][perm, :]                       # (16, 16)
    b3 = params["fc1_b"]                                # (1, 16)
    # Lane-dense fc2: pad output dim 4 -> 128 with zeros; slice in wrapper.
    w4 = jnp.zeros((params["fc2_w"].shape[0], _OUT_PAD), jnp.float32)
    w4 = w4.at[:, :params["fc2_w"].shape[1]].set(params["fc2_w"])
    b4 = jnp.zeros((1, _OUT_PAD), jnp.float32)
    b4 = b4.at[:, :params["fc2_b"].shape[1]].set(params["fc2_b"])
    return (w1, b1, w2, b2, w3, b3, w4, b4)


# ------------------------------- forward --------------------------------------

@jax.jit
def forward(x, packed):
    B, C, H, W = x.shape                                       # (B, 2, 2, 2)
    # Pixel-major (NHWC) flatten: row b holds [p0(c0,c1), p1(c0,c1), ...].
    x_flat = jnp.transpose(x, (0, 2, 3, 1)).reshape(B, H * W * C)   # (B, 8)
    vmem = pl.BlockSpec(memory_space=pltpu.MemorySpace.VMEM)
    out = pl.pallas_call(
        fused_forward_kernel,
        out_shape=jax.ShapeDtypeStruct((B, _OUT_PAD), jnp.float32),
        in_specs=[vmem] * 9,
        out_specs=vmem,
    )(x_flat, *packed)
    return out[:, :4].reshape(-1, 2, 2)                        # (B, 2, 2)


# --------------------------- pure-JAX reference --------------------------------

def reference_forward(x, params):
    B = x.shape[0]
    hp = jax.lax.Precision.HIGHEST
    h = jnp.einsum("bchw,co->bohw", x, params["conv1_w"], precision=hp)
    h = jnp.maximum(h + params["conv1_b"][0][None, :, None, None], 0.0)
    y = jnp.einsum("bchw,co->bohw", h, params["conv2_w"], precision=hp)
    y = jnp.maximum(y + params["conv2_b"][0][None, :, None, None], 0.0)
    feat = y.reshape(B, -1)                                    # torch .view(B,-1)
    z = jnp.maximum(jnp.dot(feat, params["fc1_w"], precision=hp) + params["fc1_b"], 0.0)
    out = jnp.dot(z, params["fc2_w"], precision=hp) + params["fc2_b"]
    return out.reshape(-1, 2, 2)


if __name__ == "__main__":
    key = jax.random.PRNGKey(0)
    k_x, k_p = jax.random.split(key)
    # fc1 expects 4*2*2 features after the convs => spatial must be 2x2.
    x = jax.random.normal(k_x, (2, 2, 2, 2), jnp.float32)      # (B=2, C=2, H=2, W=2)
    params = init_params(k_p)
    packed = pack_params(params)

    out = forward(x, packed)
    jax.block_until_ready(out)
    assert out.shape == (2, 2, 2)

    ref = reference_forward(x, params)
    assert jnp.allclose(out, ref, rtol=1e-2, atol=1e-3), "mismatch vs reference"
    print("KERNEL_OK")
</pallas_src>

<mosaic_0001>
module attributes {stable_mosaic.version = 11 : i64} {
  func.func @fused_forward_kernel(%arg0: memref<2x8xf32, #tpu.memory_space<vmem>>, %arg1: memref<8x32xf32, #tpu.memory_space<vmem>>, %arg2: memref<1x32xf32, #tpu.memory_space<vmem>>, %arg3: memref<32x16xf32, #tpu.memory_space<vmem>>, %arg4: memref<1x16xf32, #tpu.memory_space<vmem>>, %arg5: memref<16x16xf32, #tpu.memory_space<vmem>>, %arg6: memref<1x16xf32, #tpu.memory_space<vmem>>, %arg7: memref<16x128xf32, #tpu.memory_space<vmem>>, %arg8: memref<1x128xf32, #tpu.memory_space<vmem>>, %arg9: memref<2x128xf32, #tpu.memory_space<vmem>>) attributes {dimension_semantics = [], scalar_prefetch = 0 : i64, scratch_operands = 0 : i64, tpu.core_type = #tpu.core_type<tc>} {
    %c0 = arith.constant 0 : index
    %c0_0 = arith.constant 0 : index
    %0 = vector.load %arg0[%c0, %c0_0] : memref<2x8xf32, #tpu.memory_space<vmem>>, vector<2x8xf32>
    %c0_1 = arith.constant 0 : index
    %c0_2 = arith.constant 0 : index
    %1 = vector.load %arg1[%c0_1, %c0_2] : memref<8x32xf32, #tpu.memory_space<vmem>>, vector<8x32xf32>
    %cst = arith.constant dense<0.000000e+00> : vector<2x32xf32>
    %2 = tpu.matmul %0, %1, %cst {dimension_numbers = #tpu.dot_dimension_numbers<[1], [0], [0], [1], [0, 0, 1, 1], [], []>} : vector<2x8xf32>, vector<8x32xf32>, vector<2x32xf32> -> vector<2x32xf32>
    %c0_3 = arith.constant 0 : index
    %c0_4 = arith.constant 0 : index
    %3 = vector.load %arg2[%c0_3, %c0_4] : memref<1x32xf32, #tpu.memory_space<vmem>>, vector<1x32xf32>
    %4 = vector.broadcast %3 : vector<1x32xf32> to vector<2x32xf32>
    %5 = arith.addf %2, %4 : vector<2x32xf32>
    %cst_5 = arith.constant 0.000000e+00 : f32
    %6 = vector.broadcast %cst_5 : f32 to vector<2x32xf32>
    %7 = arith.maximumf %5, %6 : vector<2x32xf32>
    %c0_6 = arith.constant 0 : index
    %c0_7 = arith.constant 0 : index
    %8 = vector.load %arg3[%c0_6, %c0_7] : memref<32x16xf32, #tpu.memory_space<vmem>>, vector<32x16xf32>
    %cst_8 = arith.constant dense<0.000000e+00> : vector<2x16xf32>
    %9 = tpu.matmul %7, %8, %cst_8 {dimension_numbers = #tpu.dot_dimension_numbers<[1], [0], [0], [1], [0, 0, 1, 1], [], []>} : vector<2x32xf32>, vector<32x16xf32>, vector<2x16xf32> -> vector<2x16xf32>
    %c0_9 = arith.constant 0 : index
    %c0_10 = arith.constant 0 : index
    %10 = vector.load %arg4[%c0_9, %c0_10] : memref<1x16xf32, #tpu.memory_space<vmem>>, vector<1x16xf32>
    %11 = vector.broadcast %10 : vector<1x16xf32> to vector<2x16xf32>
    %12 = arith.addf %9, %11 : vector<2x16xf32>
    %cst_11 = arith.constant 0.000000e+00 : f32
    %13 = vector.broadcast %cst_11 : f32 to vector<2x16xf32>
    %14 = arith.maximumf %12, %13 : vector<2x16xf32>
    %c0_12 = arith.constant 0 : index
    %c0_13 = arith.constant 0 : index
    %15 = vector.load %arg5[%c0_12, %c0_13] : memref<16x16xf32, #tpu.memory_space<vmem>>, vector<16x16xf32>
    %cst_14 = arith.constant dense<0.000000e+00> : vector<2x16xf32>
    %16 = tpu.matmul %14, %15, %cst_14 {dimension_numbers = #tpu.dot_dimension_numbers<[1], [0], [0], [1], [0, 0, 1, 1], [], []>} : vector<2x16xf32>, vector<16x16xf32>, vector<2x16xf32> -> vector<2x16xf32>
    %c0_15 = arith.constant 0 : index
    %c0_16 = arith.constant 0 : index
    %17 = vector.load %arg6[%c0_15, %c0_16] : memref<1x16xf32, #tpu.memory_space<vmem>>, vector<1x16xf32>
    %18 = vector.broadcast %17 : vector<1x16xf32> to vector<2x16xf32>
    %19 = arith.addf %16, %18 : vector<2x16xf32>
    %cst_17 = arith.constant 0.000000e+00 : f32
    %20 = vector.broadcast %cst_17 : f32 to vector<2x16xf32>
    %21 = arith.maximumf %19, %20 : vector<2x16xf32>
    %c0_18 = arith.constant 0 : index
    %c0_19 = arith.constant 0 : index
    %22 = vector.load %arg7[%c0_18, %c0_19] : memref<16x128xf32, #tpu.memory_space<vmem>>, vector<16x128xf32>
    %cst_20 = arith.constant dense<0.000000e+00> : vector<2x128xf32>
    %23 = tpu.matmul %21, %22, %cst_20 {dimension_numbers = #tpu.dot_dimension_numbers<[1], [0], [0], [1], [0, 0, 1, 1], [], []>} : vector<2x16xf32>, vector<16x128xf32>, vector<2x128xf32> -> vector<2x128xf32>
    %c0_21 = arith.constant 0 : index
    %c0_22 = arith.constant 0 : index
    %24 = vector.load %arg8[%c0_21, %c0_22] : memref<1x128xf32, #tpu.memory_space<vmem>>, vector<1x128xf32>
    %25 = vector.broadcast %24 : vector<1x128xf32> to vector<2x128xf32>
    %26 = arith.addf %23, %25 : vector<2x128xf32>
    %c0_23 = arith.constant 0 : index
    %c0_24 = arith.constant 0 : index
    %27 = vector.load %arg9[%c0_23, %c0_24] : memref<2x128xf32, #tpu.memory_space<vmem>>, vector<2x128xf32>
    tpu.vector_store %arg9[%c0_23, %c0_24], %26 {strides = array<i32>} : memref<2x128xf32, #tpu.memory_space<vmem>>, vector<2x128xf32>,
    return
  }
}

</mosaic_0001>

<llo_original>
// kernel: forward.1
$region0: #{forward.1}
  #allocation0 [shape = 'u32[]', space=smem, size = 0x4, offset = 0x4, fixed_abs, tag = 'smem constant byte address 0x4 - core index']
  #allocation1 [shape = 'u32[144,128]{1,0:T(1,128)}', space=vmem, size = 0x12000, scoped, tag = 'internal scratch']
  %s0 = inlined_call_operand.vmem [shape: f32[2,8], index: 0, kind: input, shape index: {}]
  %s1 = inlined_call_operand.vmem [shape: f32[8,32], index: 1, kind: input, shape index: {}]
  %s2 = inlined_call_operand.vmem [shape: f32[1,32], index: 2, kind: input, shape index: {}]
  %s3 = inlined_call_operand.vmem [shape: f32[32,16], index: 3, kind: input, shape index: {}]
  %s4 = inlined_call_operand.vmem [shape: f32[1,16], index: 4, kind: input, shape index: {}]
  %s5 = inlined_call_operand.vmem [shape: f32[16,16], index: 5, kind: input, shape index: {}]
  %s6 = inlined_call_operand.vmem [shape: f32[1,16], index: 6, kind: input, shape index: {}]
  %s7 = inlined_call_operand.vmem [shape: f32[16,128], index: 7, kind: input, shape index: {}]
  %s8 = inlined_call_operand.vmem [shape: f32[1,128], index: 8, kind: input, shape index: {}]
  %s9 = inlined_call_operand.vmem [shape: f32[2,128], index: 9, kind: output, shape index: {}]
  %s10 = sld [smem:[#allocation0]]
  $region46: #{forward.1} parent=0
    _
  %s12 = ssub.s32 1, %s10
  %s13 = scalar_select 0, %s12, %s10
  // Predicated region
  $region2: #{forward.1} parent=0 // pred_check
    _
  $region3: #{forward.1} parent=0 // pred_check_branch
    %15 = sbr.rel (0) target = $region5
  $region4: #{forward.1} parent=0 // pred_region
    _
  $region5: #{forward.1} parent=0 // pred_fallthru
    _
  // Predicated region
  $region6: #{forward.1} parent=0 // pred_check
    _
  $region7: #{forward.1} parent=0 // pred_check_branch
    %17 = sbr.rel (0) target = $region9
  $region8: #{forward.1} parent=0 // pred_region
    _
  $region9: #{forward.1} parent=0 // pred_fallthru
    _
  // Predicated region
  $region10: #{forward.1} parent=0 // pred_check
    _
  $region11: #{forward.1} parent=0 // pred_check_branch
    %19 = sbr.rel (0) target = $region13
  $region12: #{forward.1} parent=0 // pred_region
    _
  $region13: #{forward.1} parent=0 // pred_fallthru
    _
  // Predicated region
  $region14: #{forward.1} parent=0 // pred_check
    _
  $region15: #{forward.1} parent=0 // pred_check_branch
    %21 = sbr.rel (0) target = $region17
  $region16: #{forward.1} parent=0 // pred_region
    _
  $region17: #{forward.1} parent=0 // pred_fallthru
    _
  // Predicated region
  $region18: #{forward.1} parent=0 // pred_check
    _
  $region19: #{forward.1} parent=0 // pred_check_branch
    %23 = sbr.rel (0) target = $region21
  $region20: #{forward.1} parent=0 // pred_region
    _
  $region21: #{forward.1} parent=0 // pred_fallthru
    _
  // Predicated region
  $region22: #{forward.1} parent=0 // pred_check
    _
  $region23: #{forward.1} parent=0 // pred_check_branch
    %25 = sbr.rel (0) target = $region25
  $region24: #{forward.1} parent=0 // pred_region
    _
  $region25: #{forward.1} parent=0 // pred_fallthru
    _
  // Predicated region
  $region26: #{forward.1} parent=0 // pred_check
    _
  $region27: #{forward.1} parent=0 // pred_check_branch
    %27 = sbr.rel (0) target = $region29
  $region28: #{forward.1} parent=0 // pred_region
    _
  $region29: #{forward.1} parent=0 // pred_fallthru
    _
  // Predicated region
  $region30: #{forward.1} parent=0 // pred_check
    _
  $region31: #{forward.1} parent=0 // pred_check_branch
    %29 = sbr.rel (0) target = $region33
  $region32: #{forward.1} parent=0 // pred_region
    _
  $region33: #{forward.1} parent=0 // pred_fallthru
    _
  // Predicated region
  $region34: #{forward.1} parent=0 // pred_check
    _
  $region35: #{forward.1} parent=0 // pred_check_branch
    %31 = sbr.rel (0) target = $region37
  $region36: #{forward.1} parent=0 // pred_region
    _
  $region37: #{forward.1} parent=0 // pred_fallthru
    _
  %v32 = vld [vmem:[%s0] sm:$0x3]
  %v33 = vld [vmem:[%s1] sm:$0xff]
  %v34 = vld [vmem:[%s2] sm:$0x1]
  %v36 = vlaneseq
  %v37 = vshrl.u32 %v36, 7
  %v38 = vsub.s32 0, %v37
  %v39 = vrot.slane %v34, %v38
  %vm41 = vcmask 64512
  %v43 = vsel %vm41, %v32, 0
  %45 = vmatprep.subr.mxu0 0.0
  %46 = vmatpush1.msra.mxu0 %v33
  %47 = vmatprep.subr.mxu0 0.0
  %48 = vmatpush1.msra.mxu0 0.0
  %49 = vmatprep.subr.mxu0 0.0
  %50 = vmatpush1.msra.mxu0 0.0
  %51 = vmatprep.subr.mxu0 0.0
  %52 = vmatpush1.msra.mxu0 0.0
  %53 = vmatprep.subr.mxu0 0.0
  %54 = vmatpush1.msra.mxu0 0.0
  %55 = vmatprep.subr.mxu0 0.0
  %56 = vmatpush1.msra.mxu0 0.0
  %57 = vmatprep.subr.mxu0 0.0
  %58 = vmatpush1.msra.mxu0 0.0
  %59 = vmatprep.subr.mxu0 0.0
  %60 = vmatpush1.msra.mxu0 0.0
  %61 = vmatprep.subr.mxu0 0.0
  %62 = vmatpush1.msra.mxu0 0.0
  %63 = vmatprep.subr.mxu0 0.0
  %64 = vmatpush1.msra.mxu0 0.0
  %65 = vmatprep.subr.mxu0 0.0
  %66 = vmatpush1.msra.mxu0 0.0
  %67 = vmatprep.subr.mxu0 0.0
  %68 = vmatpush1.msra.mxu0 0.0
  %69 = vmatprep.subr.mxu0 0.0
  %70 = vmatpush1.msra.mxu0 0.0
  %71 = vmatprep.subr.mxu0 0.0
  %72 = vmatpush1.msra.mxu0 0.0
  %73 = vmatprep.subr.mxu0 0.0
  %74 = vmatpush1.msra.mxu0 0.0
  %75 = vmatprep.subr.mxu0 0.0
  %76 = vmatpush1.msra.mxu0 0.0
  %77 = vmatprep.subr.mxu0 0.0
  %78 = vmatpush1.msra.mxu0 0.0
  %79 = vmatprep.subr.mxu0 0.0
  %80 = vmatpush1.msra.mxu0 0.0
  %81 = vmatprep.subr.mxu0 0.0
  %82 = vmatpush1.msra.mxu0 0.0
  %83 = vmatprep.subr.mxu0 0.0
  %84 = vmatpush1.msra.mxu0 0.0
  %85 = vmatprep.subr.mxu0 0.0
  %86 = vmatpush1.msra.mxu0 0.0
  %87 = vmatprep.subr.mxu0 0.0
  %88 = vmatpush1.msra.mxu0 0.0
  %89 = vmatprep.subr.mxu0 0.0
  %90 = vmatpush1.msra.mxu0 0.0
  %91 = vmatprep.subr.mxu0 0.0
  %92 = vmatpush1.msra.mxu0 0.0
  %93 = vmatprep.subr.mxu0 0.0
  %94 = vmatpush1.msra.mxu0 0.0
  %95 = vmatprep.subr.mxu0 0.0
  %96 = vmatpush1.msra.mxu0 0.0
  %97 = vmatprep.subr.mxu0 0.0
  %98 = vmatpush1.msra.mxu0 0.0
  %99 = vmatprep.subr.mxu0 0.0
  %100 = vmatpush1.msra.mxu0 0.0
  %101 = vmatprep.subr.mxu0 0.0
  %102 = vmatpush1.msra.mxu0 0.0
  %103 = vmatprep.subr.mxu0 0.0
  %104 = vmatpush1.msra.mxu0 0.0
  %105 = vmatprep.subr.mxu0 0.0
  %106 = vmatpush1.msra.mxu0 0.0
  %107 = vmatprep.subr.mxu0 0.0
  %108 = vmatpush1.msra.mxu0 0.0
  %109 = vmatprep.mubr.f32.mxu0 0.0
  %110 = vmatmul.mubr.f32.gmra.mrb[0].mxu0 %v43
  %v111 = vpop.f32.mrb[0].mxu0
  %v112 = vadd.f32 %v39, %v111
  %v113 = vpop.f32.mrb[0].mxu0
  %114 = vdwg.mxu0
  %v115 = vmax.f32 %v112, 0.0
  %v116 = vld [vmem:[%s3] sm:$0xff]
  %v117 = vld [vmem:[%s3 + $0x8] sm:$0xff]
  %v118 = vld [vmem:[%s3 + $0x10] sm:$0xff]
  %v119 = vld [vmem:[%s3 + $0x18] sm:$0xff]
  %v120 = vld [vmem:[%s4] sm:$0x1]
  %v122 = vlaneseq
  %v123 = vshrl.u32 %v122, 7
  %v124 = vsub.s32 0, %v123
  %v125 = vrot.slane %v120, %v124
  %vm127 = vcmask 261120
  %v129 = vsel %vm127, %v115, 0
  %131 = vmatprep.subr.mxu0 0.0
  %132 = vmatpush1.msra.mxu0 %v116
  %133 = vmatprep.subr.mxu0 0.0
  %134 = vmatpush1.msra.mxu0 %v117
  %135 = vmatprep.subr.mxu0 0.0
  %136 = vmatpush1.msra.mxu0 %v118
  %137 = vmatprep.subr.mxu0 0.0
  %138 = vmatpush1.msra.mxu0 %v119
  %139 = vmatprep.subr.mxu0 0.0
  %140 = vmatpush1.msra.mxu0 0.0
  %141 = vmatprep.subr.mxu0 0.0
  %142 = vmatpush1.msra.mxu0 0.0
  %143 = vmatprep.subr.mxu0 0.0
  %144 = vmatpush1.msra.mxu0 0.0
  %145 = vmatprep.subr.mxu0 0.0
  %146 = vmatpush1.msra.mxu0 0.0
  %147 = vmatprep.subr.mxu0 0.0
  %148 = vmatpush1.msra.mxu0 0.0
  %149 = vmatprep.subr.mxu0 0.0
  %150 = vmatpush1.msra.mxu0 0.0
  %151 = vmatprep.subr.mxu0 0.0
  %152 = vmatpush1.msra.mxu0 0.0
  %153 = vmatprep.subr.mxu0 0.0
  %154 = vmatpush1.msra.mxu0 0.0
  %155 = vmatprep.subr.mxu0 0.0
  %156 = vmatpush1.msra.mxu0 0.0
  %157 = vmatprep.subr.mxu0 0.0
  %158 = vmatpush1.msra.mxu0 0.0
  %159 = vmatprep.subr.mxu0 0.0
  %160 = vmatpush1.msra.mxu0 0.0
  %161 = vmatprep.subr.mxu0 0.0
  %162 = vmatpush1.msra.mxu0 0.0
  %163 = vmatprep.subr.mxu0 0.0
  %164 = vmatpush1.msra.mxu0 0.0
  %165 = vmatprep.subr.mxu0 0.0
  %166 = vmatpush1.msra.mxu0 0.0
  %167 = vmatprep.subr.mxu0 0.0
  %168 = vmatpush1.msra.mxu0 0.0
  %169 = vmatprep.subr.mxu0 0.0
  %170 = vmatpush1.msra.mxu0 0.0
  %171 = vmatprep.subr.mxu0 0.0
  %172 = vmatpush1.msra.mxu0 0.0
  %173 = vmatprep.subr.mxu0 0.0
  %174 = vmatpush1.msra.mxu0 0.0
  %175 = vmatprep.subr.mxu0 0.0
  %176 = vmatpush1.msra.mxu0 0.0
  %177 = vmatprep.subr.mxu0 0.0
  %178 = vmatpush1.msra.mxu0 0.0
  %179 = vmatprep.subr.mxu0 0.0
  %180 = vmatpush1.msra.mxu0 0.0
  %181 = vmatprep.subr.mxu0 0.0
  %182 = vmatpush1.msra.mxu0 0.0
  %183 = vmatprep.subr.mxu0 0.0
  %184 = vmatpush1.msra.mxu0 0.0
  %185 = vmatprep.subr.mxu0 0.0
  %186 = vmatpush1.msra.mxu0 0.0
  %187 = vmatprep.subr.mxu0 0.0
  %188 = vmatpush1.msra.mxu0 0.0
  %189 = vmatprep.subr.mxu0 0.0
  %190 = vmatpush1.msra.mxu0 0.0
  %191 = vmatprep.subr.mxu0 0.0
  %192 = vmatpush1.msra.mxu0 0.0
  %193 = vmatprep.subr.mxu0 0.0
  %194 = vmatpush1.msra.mxu0 0.0
  %195 = vmatprep.mubr.f32.mxu0 0.0
  %196 = vmatmul.mubr.f32.gmra.mrb[0].mxu0 %v129
  %v197 = vpop.f32.mrb[0].mxu0
  %v198 = vadd.f32 %v125, %v197
  %v199 = vpop.f32.mrb[0].mxu0
  %200 = vdwg.mxu0
  %v201 = vmax.f32 %v198, 0.0
  %v202 = vld [vmem:[%s5] sm:$0xff]
  %v203 = vld [vmem:[%s5 + $0x8] sm:$0xff]
  %v204 = vld [vmem:[%s6] sm:$0x1]
  %v206 = vlaneseq
  %v207 = vshrl.u32 %v206, 7
  %v208 = vsub.s32 0, %v207
  %v209 = vrot.slane %v204, %v208
  %vm211 = vcmask 130048
  %v213 = vsel %vm211, %v201, 0
  %215 = vmatprep.subr.mxu0 0.0
  %216 = vmatpush1.msra.mxu0 %v202
  %217 = vmatprep.subr.mxu0 0.0
  %218 = vmatpush1.msra.mxu0 %v203
  %219 = vmatprep.subr.mxu0 0.0
  %220 = vmatpush1.msra.mxu0 0.0
  %221 = vmatprep.subr.mxu0 0.0
  %222 = vmatpush1.msra.mxu0 0.0
  %223 = vmatprep.subr.mxu0 0.0
  %224 = vmatpush1.msra.mxu0 0.0
  %225 = vmatprep.subr.mxu0 0.0
  %226 = vmatpush1.msra.mxu0 0.0
  %227 = vmatprep.subr.mxu0 0.0
  %228 = vmatpush1.msra.mxu0 0.0
  %229 = vmatprep.subr.mxu0 0.0
  %230 = vmatpush1.msra.mxu0 0.0
  %231 = vmatprep.subr.mxu0 0.0
  %232 = vmatpush1.msra.mxu0 0.0
  %233 = vmatprep.subr.mxu0 0.0
  %234 = vmatpush1.msra.mxu0 0.0
  %235 = vmatprep.subr.mxu0 0.0
  %236 = vmatpush1.msra.mxu0 0.0
  %237 = vmatprep.subr.mxu0 0.0
  %238 = vmatpush1.msra.mxu0 0.0
  %239 = vmatprep.subr.mxu0 0.0
  %240 = vmatpush1.msra.mxu0 0.0
  %241 = vmatprep.subr.mxu0 0.0
  %242 = vmatpush1.msra.mxu0 0.0
  %243 = vmatprep.subr.mxu0 0.0
  %244 = vmatpush1.msra.mxu0 0.0
  %245 = vmatprep.subr.mxu0 0.0
  %246 = vmatpush1.msra.mxu0 0.0
  %247 = vmatprep.subr.mxu0 0.0
  %248 = vmatpush1.msra.mxu0 0.0
  %249 = vmatprep.subr.mxu0 0.0
  %250 = vmatpush1.msra.mxu0 0.0
  %251 = vmatprep.subr.mxu0 0.0
  %252 = vmatpush1.msra.mxu0 0.0
  %253 = vmatprep.subr.mxu0 0.0
  %254 = vmatpush1.msra.mxu0 0.0
  %255 = vmatprep.subr.mxu0 0.0
  %256 = vmatpush1.msra.mxu0 0.0
  %257 = vmatprep.subr.mxu0 0.0
  %258 = vmatpush1.msra.mxu0 0.0
  %259 = vmatprep.subr.mxu0 0.0
  %260 = vmatpush1.msra.mxu0 0.0
  %261 = vmatprep.subr.mxu0 0.0
  %262 = vmatpush1.msra.mxu0 0.0
  %263 = vmatprep.subr.mxu0 0.0
  %264 = vmatpush1.msra.mxu0 0.0
  %265 = vmatprep.subr.mxu0 0.0
  %266 = vmatpush1.msra.mxu0 0.0
  %267 = vmatprep.subr.mxu0 0.0
  %268 = vmatpush1.msra.mxu0 0.0
  %269 = vmatprep.subr.mxu0 0.0
  %270 = vmatpush1.msra.mxu0 0.0
  %271 = vmatprep.subr.mxu0 0.0
  %272 = vmatpush1.msra.mxu0 0.0
  %273 = vmatprep.subr.mxu0 0.0
  %274 = vmatpush1.msra.mxu0 0.0
  %275 = vmatprep.subr.mxu0 0.0
  %276 = vmatpush1.msra.mxu0 0.0
  %277 = vmatprep.subr.mxu0 0.0
  %278 = vmatpush1.msra.mxu0 0.0
  %279 = vmatprep.mubr.f32.mxu0 0.0
  %280 = vmatmul.mubr.f32.gmra.mrb[0].mxu0 %v213
  %v281 = vpop.f32.mrb[0].mxu0
  %v282 = vadd.f32 %v209, %v281
  %v283 = vpop.f32.mrb[0].mxu0
  %284 = vdwg.mxu0
  %v285 = vmax.f32 %v282, 0.0
  %v286 = vld [vmem:[%s7] sm:$0xff]
  %v287 = vld [vmem:[%s7 + $0x8] sm:$0xff]
  %v288 = vld [vmem:[%s8] sm:$0x1]
  %v290 = vlaneseq
  %v291 = vshrl.u32 %v290, 7
  %v292 = vsub.s32 0, %v291
  %v293 = vrot.slane %v288, %v292
  %v296 = vsel %vm211, %v285, 0
  %298 = vmatprep.subr.mxu0 0.0
  %299 = vmatpush1.msra.mxu0 %v286
  %300 = vmatprep.subr.mxu0 0.0
  %301 = vmatpush1.msra.mxu0 %v287
  %302 = vmatprep.subr.mxu0 0.0
  %303 = vmatpush1.msra.mxu0 0.0
  %304 = vmatprep.subr.mxu0 0.0
  %305 = vmatpush1.msra.mxu0 0.0
  %306 = vmatprep.subr.mxu0 0.0
  %307 = vmatpush1.msra.mxu0 0.0
  %308 = vmatprep.subr.mxu0 0.0
  %309 = vmatpush1.msra.mxu0 0.0
  %310 = vmatprep.subr.mxu0 0.0
  %311 = vmatpush1.msra.mxu0 0.0
  %312 = vmatprep.subr.mxu0 0.0
  %313 = vmatpush1.msra.mxu0 0.0
  %314 = vmatprep.subr.mxu0 0.0
  %315 = vmatpush1.msra.mxu0 0.0
  %316 = vmatprep.subr.mxu0 0.0
  %317 = vmatpush1.msra.mxu0 0.0
  %318 = vmatprep.subr.mxu0 0.0
  %319 = vmatpush1.msra.mxu0 0.0
  %320 = vmatprep.subr.mxu0 0.0
  %321 = vmatpush1.msra.mxu0 0.0
  %322 = vmatprep.subr.mxu0 0.0
  %323 = vmatpush1.msra.mxu0 0.0
  %324 = vmatprep.subr.mxu0 0.0
  %325 = vmatpush1.msra.mxu0 0.0
  %326 = vmatprep.subr.mxu0 0.0
  %327 = vmatpush1.msra.mxu0 0.0
  %328 = vmatprep.subr.mxu0 0.0
  %329 = vmatpush1.msra.mxu0 0.0
  %330 = vmatprep.subr.mxu0 0.0
  %331 = vmatpush1.msra.mxu0 0.0
  %332 = vmatprep.subr.mxu0 0.0
  %333 = vmatpush1.msra.mxu0 0.0
  %334 = vmatprep.subr.mxu0 0.0
  %335 = vmatpush1.msra.mxu0 0.0
  %336 = vmatprep.subr.mxu0 0.0
  %337 = vmatpush1.msra.mxu0 0.0
  %338 = vmatprep.subr.mxu0 0.0
  %339 = vmatpush1.msra.mxu0 0.0
  %340 = vmatprep.subr.mxu0 0.0
  %341 = vmatpush1.msra.mxu0 0.0
  %342 = vmatprep.subr.mxu0 0.0
  %343 = vmatpush1.msra.mxu0 0.0
  %344 = vmatprep.subr.mxu0 0.0
  %345 = vmatpush1.msra.mxu0 0.0
  %346 = vmatprep.subr.mxu0 0.0
  %347 = vmatpush1.msra.mxu0 0.0
  %348 = vmatprep.subr.mxu0 0.0
  %349 = vmatpush1.msra.mxu0 0.0
  %350 = vmatprep.subr.mxu0 0.0
  %351 = vmatpush1.msra.mxu0 0.0
  %352 = vmatprep.subr.mxu0 0.0
  %353 = vmatpush1.msra.mxu0 0.0
  %354 = vmatprep.subr.mxu0 0.0
  %355 = vmatpush1.msra.mxu0 0.0
  %356 = vmatprep.subr.mxu0 0.0
  %357 = vmatpush1.msra.mxu0 0.0
  %358 = vmatprep.subr.mxu0 0.0
  %359 = vmatpush1.msra.mxu0 0.0
  %360 = vmatprep.subr.mxu0 0.0
  %361 = vmatpush1.msra.mxu0 0.0
  %362 = vmatprep.mubr.f32.mxu0 0.0
  %363 = vmatmul.mubr.f32.gmra.mrb[0].mxu0 %v296
  %v364 = vpop.f32.mrb[0].mxu0
  %v365 = vadd.f32 %v293, %v364
  %v366 = vpop.f32.mrb[0].mxu0
  %367 = vdwg.mxu0
  %368 = vst [vmem:[%s9] sm:$0x3] %v365
  // Predicated region
  $region38: #{forward.1} parent=0 // pred_check
    _
  $region39: #{forward.1} parent=0 // pred_check_branch
    %370 = sbr.rel (0) target = $region41
  $region40: #{forward.1} parent=0 // pred_region
    _
  $region41: #{forward.1} parent=0 // pred_fallthru
    _
  // Predicated region
  $region42: #{forward.1} parent=0 // pred_check
    _
  $region43: #{forward.1} parent=0 // pred_check_branch
    %372 = sbr.rel (0) target = $region45
  $region44: #{forward.1} parent=0 // pred_region
    _
  $region45: #{forward.1} parent=0 // pred_fallthru
    _

</llo_original>
